<compile_context>
chip_gen: v5e
topology: v5e:2x2
jax: 0.10.0
libtpu: 0.0.40
codegen_flags: <defaults>
</compile_context>

<pallas_src>
import math

import jax
import jax.numpy as jnp
from jax.experimental import pallas as pl
from jax.experimental.pallas import tpu as pltpu

_FWD_TB = 2048          # default batch tile for policy_forward
_LP_TB = 4096           # default batch tile for policy_get_log_prob
_HALF_LOG_2PI = 0.5 * math.log(2.0 * math.pi)


def _round_up(x, m):
    return ((x + m - 1) // m) * m


def _choose_tb(b, tb_default):
    """Batch tile: <= tb_default rows, sublane-aligned (x8), and an even
    number of tiles so both v7x TensorCores get work when the batch is big."""
    n_tiles = max(2, pl.cdiv(b, tb_default))
    n_tiles = 2 * pl.cdiv(n_tiles, 2)           # even tile count
    return _round_up(pl.cdiv(b, n_tiles), 8)


# ----------------------------- kernels ------------------------------------ #

def _policy_fwd_kernel(s_ref, w1_ref, b1_ref, w2_ref, b2_ref, w3_ref, b3_ref,
                       mean_ref):
    bf = jnp.bfloat16
    # Linear(s_dim, H) + ReLU   (bf16 operands, f32 accumulate / elementwise).
    h1 = jnp.dot(s_ref[...].astype(bf), w1_ref[...],
                 preferred_element_type=jnp.float32) + b1_ref[...]
    h1 = jnp.maximum(h1, 0.0)
    # Linear(H, H) + ReLU  (hidden padded to 128 lanes at param prep).
    h2 = jnp.dot(h1.astype(bf), w2_ref[...],
                 preferred_element_type=jnp.float32) + b2_ref[...]
    h2 = jnp.maximum(h2, 0.0)
    # Linear(H, a_dim): only the useful a_dim columns are written back.
    mean_ref[...] = (jnp.dot(h2.astype(bf), w3_ref[...],
                             preferred_element_type=jnp.float32)
                     + b3_ref[...]).astype(mean_ref.dtype)


def _policy_logprob_kernel(s_ref, a_ref, w1_ref, b1_ref, w2_ref, b2_ref,
                           w3_ref, b3_ref, lstd_ref, lp_ref):
    bf = jnp.bfloat16
    h1 = jnp.maximum(
        jnp.dot(s_ref[...].astype(bf), w1_ref[...],
                preferred_element_type=jnp.float32) + b1_ref[...], 0.0)
    h2 = jnp.maximum(
        jnp.dot(h1.astype(bf), w2_ref[...],
                preferred_element_type=jnp.float32) + b2_ref[...], 0.0)
    mean = jnp.dot(h2.astype(bf), w3_ref[...],
                   preferred_element_type=jnp.float32) + b3_ref[...]
    # Fused normal_log_density (f32): std = exp(log_std), var = std^2.
    lstd = lstd_ref[...]                       # (1, a_dim), broadcasts over rows
    inv_2var = 0.5 * jnp.exp(-2.0 * lstd)      # EUP transcendental
    diff = a_ref[...] - mean
    logd = -(diff * diff) * inv_2var - _HALF_LOG_2PI - lstd
    lp_ref[...] = jnp.sum(logd, axis=1, keepdims=True).astype(lp_ref.dtype)


# ----------------------------- param prep ---------------------------------- #

def prepare_params(params):
    """One-time parameter prep (outside the jitted call path):
       * cast matmul weights to bf16,
       * pad the hidden dim to a lane-dense multiple of 128 with zeros
         (correct: ReLU(0 + 0) = 0, zero rows contribute nothing downstream).
    """
    w1, b1, w2, b2, w3, b3, a_log_std = params
    s_dim, h = w1.shape
    a_dim = w3.shape[1]
    hp = _round_up(h, 128)
    bf = jnp.bfloat16

    w1p = jnp.zeros((s_dim, hp), bf).at[:, :h].set(w1.astype(bf))
    b1p = jnp.zeros((1, hp), jnp.float32).at[:, :h].set(
        jnp.reshape(b1, (1, h)).astype(jnp.float32))
    w2p = jnp.zeros((hp, hp), bf).at[:h, :h].set(w2.astype(bf))
    b2p = jnp.zeros((1, hp), jnp.float32).at[:, :h].set(
        jnp.reshape(b2, (1, h)).astype(jnp.float32))
    w3p = jnp.zeros((hp, a_dim), bf).at[:h, :].set(w3.astype(bf))
    b3p = jnp.reshape(b3, (1, a_dim)).astype(jnp.float32)
    lstd = jnp.reshape(a_log_std, (1, a_dim)).astype(jnp.float32)
    return (w1p, b1p, w2p, b2p, w3p, b3p, lstd)


# ----------------------------- wrappers ------------------------------------ #

def _const_spec(arr):
    return pl.BlockSpec(arr.shape, lambda i: (0, 0))


@jax.jit
def policy_forward(s, prep):
    """Returns (a_mean, a_log_std) with shapes [B, a_dim], matching Policy.forward."""
    w1p, b1p, w2p, b2p, w3p, b3p, lstd = prep
    b, s_dim = s.shape
    a_dim = w3p.shape[1]
    tb = _choose_tb(b, _FWD_TB)

    a_mean = pl.pallas_call(
        _policy_fwd_kernel,
        out_shape=jax.ShapeDtypeStruct((b, a_dim), jnp.float32),
        grid=(pl.cdiv(b, tb),),
        in_specs=[
            pl.BlockSpec((tb, s_dim), lambda i: (i, 0)),     # streamed input
            _const_spec(w1p), _const_spec(b1p),              # resident weights
            _const_spec(w2p), _const_spec(b2p),
            _const_spec(w3p), _const_spec(b3p),
        ],
        out_specs=pl.BlockSpec((tb, a_dim), lambda i: (i, 0)),
        compiler_params=pltpu.CompilerParams(dimension_semantics=("parallel",)),
    )(s, w1p, b1p, w2p, b2p, w3p, b3p)

    a_log_std = jnp.broadcast_to(lstd, a_mean.shape)
    return a_mean, a_log_std


@jax.jit
def policy_get_log_prob(s, a, prep):
    """Fused Policy.get_log_prob: MLP + normal_log_density in one kernel -> [B, 1]."""
    w1p, b1p, w2p, b2p, w3p, b3p, lstd = prep
    b, s_dim = s.shape
    a_dim = w3p.shape[1]
    tb = _choose_tb(b, _LP_TB)

    lp = pl.pallas_call(
        _policy_logprob_kernel,
        out_shape=jax.ShapeDtypeStruct((b, 1), jnp.float32),
        grid=(pl.cdiv(b, tb),),
        in_specs=[
            pl.BlockSpec((tb, s_dim), lambda i: (i, 0)),
            pl.BlockSpec((tb, a_dim), lambda i: (i, 0)),
            _const_spec(w1p), _const_spec(b1p),
            _const_spec(w2p), _const_spec(b2p),
            _const_spec(w3p), _const_spec(b3p),
            _const_spec(lstd),
        ],
        out_specs=pl.BlockSpec((tb, 1), lambda i: (i, 0)),
        compiler_params=pltpu.CompilerParams(dimension_semantics=("parallel",)),
    )(s, a.astype(jnp.float32), w1p, b1p, w2p, b2p, w3p, b3p, lstd)
    return lp


def policy_select_action(key, s, prep):
    """Policy.select_action: a ~ Normal(a_mean, exp(a_log_std)). RNG glue in JAX."""
    a_mean, a_log_std = policy_forward(s, prep)
    noise = jax.random.normal(key, a_mean.shape, a_mean.dtype)
    return a_mean + jnp.exp(a_log_std) * noise


# ----------------------------- helpers / test ------------------------------ #

def normal_log_density(x, mean, log_std):
    """Pure-JAX reference of the PyTorch normal_log_density."""
    std = jnp.exp(log_std)
    var = std ** 2
    log_density = -(x - mean) ** 2 / (2.0 * var) - _HALF_LOG_2PI - log_std
    return jnp.sum(log_density, axis=1, keepdims=True)


def init_params(key, s_dim, a_dim, hidden=64):
    """Deterministic synthetic parameter init (PyTorch-Linear-like uniform)."""
    ks = jax.random.split(key, 6)

    def linear(kw, kb, fan_in, fan_out):
        bound = 1.0 / math.sqrt(fan_in)
        w = jax.random.uniform(kw, (fan_in, fan_out), jnp.float32, -bound, bound)
        b = jax.random.uniform(kb, (1, fan_out), jnp.float32, -bound, bound)
        return w, b

    w1, b1 = linear(ks[0], ks[1], s_dim, hidden)
    w2, b2 = linear(ks[2], ks[3], hidden, hidden)
    w3, b3 = linear(ks[4], ks[5], hidden, a_dim)
    a_log_std = jnp.zeros((1, a_dim), jnp.float32)   # nn.Parameter(torch.zeros(1, a_dim))
    return (w1, b1, w2, b2, w3, b3, a_log_std)


if __name__ == "__main__":
    key = jax.random.PRNGKey(0)
    B, S_DIM, A_DIM = 8, 32, 8

    k_s, k_a, k_p, k_s2, k_a2 = jax.random.split(key, 5)
    s = jax.random.normal(k_s, (B, S_DIM), jnp.float32)
    a = jax.random.normal(k_a, (B, A_DIM), jnp.float32)
    params = init_params(k_p, S_DIM, A_DIM)
    w1, b1, w2, b2, w3, b3, lstd = params
    prep = prepare_params(params)

    a_mean, a_log_std = jax.block_until_ready(policy_forward(s, prep))
    log_prob = jax.block_until_ready(policy_get_log_prob(s, a, prep))

    # --- references ---
    def ref_fwd_f32(x):
        h1 = jnp.maximum(x @ w1 + b1, 0.0)
        h2 = jnp.maximum(h1 @ w2 + b2, 0.0)
        return h2 @ w3 + b3

    def ref_fwd_bf16(x):
        bf = jnp.bfloat16
        h1 = jnp.maximum(jnp.dot(x.astype(bf), w1.astype(bf),
                                 preferred_element_type=jnp.float32) + b1, 0.0)
        h2 = jnp.maximum(jnp.dot(h1.astype(bf), w2.astype(bf),
                                 preferred_element_type=jnp.float32) + b2, 0.0)
        return jnp.dot(h2.astype(bf), w3.astype(bf),
                       preferred_element_type=jnp.float32) + b3

    ref_mean_f32 = ref_fwd_f32(s)
    ref_mean_bf = ref_fwd_bf16(s)
    ref_logstd = jnp.broadcast_to(lstd, ref_mean_f32.shape)
    ref_lp_f32 = normal_log_density(a, ref_mean_f32, ref_logstd)
    ref_lp_bf = normal_log_density(a, ref_mean_bf, ref_logstd)

    assert a_mean.shape == (B, A_DIM) and a_log_std.shape == (B, A_DIM)
    assert jnp.allclose(a_log_std, ref_logstd), "a_log_std mismatch"
    assert jnp.allclose(a_mean, ref_mean_bf, atol=1e-3, rtol=1e-3), \
        "a_mean mismatch vs bf16-matched reference"
    # Tolerance loosened vs the f32 reference because matmul operands are bf16.
    assert jnp.allclose(a_mean, ref_mean_f32, atol=5e-2, rtol=5e-2), \
        "a_mean mismatch vs f32 reference"
    assert log_prob.shape == (B, 1)
    assert jnp.allclose(log_prob, ref_lp_bf, atol=1e-3, rtol=1e-3), \
        "log_prob mismatch vs bf16-matched reference"
    assert jnp.allclose(log_prob, ref_lp_f32, atol=2.5e-1, rtol=5e-2), \
        "log_prob mismatch vs f32 reference"

    # --- multi-tile + ragged-last-block path (grid > 1, B not tile-aligned) ---
    B2 = 300
    s2 = jax.random.normal(k_s2, (B2, S_DIM), jnp.float32)
    a2 = jax.random.normal(k_a2, (B2, A_DIM), jnp.float32)
    a_mean2, a_log_std2 = jax.block_until_ready(policy_forward(s2, prep))
    log_prob2 = jax.block_until_ready(policy_get_log_prob(s2, a2, prep))
    ref_mean2_bf = ref_fwd_bf16(s2)
    ref_lp2_bf = normal_log_density(a2, ref_mean2_bf,
                                    jnp.broadcast_to(lstd, ref_mean2_bf.shape))
    assert a_mean2.shape == (B2, A_DIM) and a_log_std2.shape == (B2, A_DIM)
    assert log_prob2.shape == (B2, 1)
    assert jnp.allclose(a_mean2, ref_mean2_bf, atol=2e-3, rtol=2e-3), \
        "multi-tile a_mean mismatch"
    assert jnp.allclose(log_prob2, ref_lp2_bf, atol=2e-3, rtol=2e-3), \
        "multi-tile log_prob mismatch"

    # --- select_action (RNG glue on top of the kernel forward) ---
    act = jax.block_until_ready(policy_select_action(jax.random.PRNGKey(1), s, prep))
    assert act.shape == (B, A_DIM)

    print("KERNEL_OK")
</pallas_src>

<mosaic_0001>
module attributes {stable_mosaic.version = 11 : i64} {
  func.func @_policy_fwd_kernel(%arg0: i32, %arg1: memref<8x32xf32, #tpu.memory_space<vmem>>, %arg2: memref<32x128xbf16, #tpu.memory_space<vmem>>, %arg3: memref<1x128xf32, #tpu.memory_space<vmem>>, %arg4: memref<128x128xbf16, #tpu.memory_space<vmem>>, %arg5: memref<1x128xf32, #tpu.memory_space<vmem>>, %arg6: memref<128x8xbf16, #tpu.memory_space<vmem>>, %arg7: memref<1x8xf32, #tpu.memory_space<vmem>>, %arg8: memref<8x8xf32, #tpu.memory_space<vmem>>) attributes {dimension_semantics = [#tpu.dimension_semantics<parallel>], iteration_bounds = array<i64: 1>, scalar_prefetch = 0 : i64, scratch_operands = 0 : i64, tpu.core_type = #tpu.core_type<tc>, window_params = [{transform_indices = @transform_0, window_bounds = array<i64: 8, 32>}, {pipeline_mode = #tpu.pipeline_mode<synchronous>, transform_indices = @transform_1, window_bounds = array<i64: 32, 128>}, {pipeline_mode = #tpu.pipeline_mode<synchronous>, transform_indices = @transform_2, window_bounds = array<i64: 1, 128>}, {pipeline_mode = #tpu.pipeline_mode<synchronous>, transform_indices = @transform_3, window_bounds = array<i64: 128, 128>}, {pipeline_mode = #tpu.pipeline_mode<synchronous>, transform_indices = @transform_4, window_bounds = array<i64: 1, 128>}, {pipeline_mode = #tpu.pipeline_mode<synchronous>, transform_indices = @transform_5, window_bounds = array<i64: 128, 8>}, {pipeline_mode = #tpu.pipeline_mode<synchronous>, transform_indices = @transform_6, window_bounds = array<i64: 1, 8>}, {transform_indices = @transform_7, window_bounds = array<i64: 8, 8>}]} {
    %c0 = arith.constant 0 : index
    %c0_0 = arith.constant 0 : index
    %0 = vector.load %arg1[%c0, %c0_0] : memref<8x32xf32, #tpu.memory_space<vmem>>, vector<8x32xf32>
    %1 = arith.truncf %0 : vector<8x32xf32> to vector<8x32xbf16>
    %c0_1 = arith.constant 0 : index
    %c0_2 = arith.constant 0 : index
    %2 = vector.load %arg2[%c0_1, %c0_2] : memref<32x128xbf16, #tpu.memory_space<vmem>>, vector<32x128xbf16>
    %cst = arith.constant dense<0.000000e+00> : vector<8x128xf32>
    %3 = tpu.matmul %1, %2, %cst {dimension_numbers = #tpu.dot_dimension_numbers<[1], [0], [0], [1], [0, 0, 1, 1], [], []>} : vector<8x32xbf16>, vector<32x128xbf16>, vector<8x128xf32> -> vector<8x128xf32>
    %c0_3 = arith.constant 0 : index
    %c0_4 = arith.constant 0 : index
    %4 = vector.load %arg3[%c0_3, %c0_4] : memref<1x128xf32, #tpu.memory_space<vmem>>, vector<1x128xf32>
    %5 = vector.broadcast %4 : vector<1x128xf32> to vector<8x128xf32>
    %6 = arith.addf %3, %5 : vector<8x128xf32>
    %cst_5 = arith.constant 0.000000e+00 : f32
    %7 = vector.broadcast %cst_5 : f32 to vector<8x128xf32>
    %8 = arith.maximumf %6, %7 : vector<8x128xf32>
    %9 = arith.truncf %8 : vector<8x128xf32> to vector<8x128xbf16>
    %c0_6 = arith.constant 0 : index
    %c0_7 = arith.constant 0 : index
    %10 = vector.load %arg4[%c0_6, %c0_7] : memref<128x128xbf16, #tpu.memory_space<vmem>>, vector<128x128xbf16>
    %cst_8 = arith.constant dense<0.000000e+00> : vector<8x128xf32>
    %11 = tpu.matmul %9, %10, %cst_8 {dimension_numbers = #tpu.dot_dimension_numbers<[1], [0], [0], [1], [0, 0, 1, 1], [], []>} : vector<8x128xbf16>, vector<128x128xbf16>, vector<8x128xf32> -> vector<8x128xf32>
    %c0_9 = arith.constant 0 : index
    %c0_10 = arith.constant 0 : index
    %12 = vector.load %arg5[%c0_9, %c0_10] : memref<1x128xf32, #tpu.memory_space<vmem>>, vector<1x128xf32>
    %13 = vector.broadcast %12 : vector<1x128xf32> to vector<8x128xf32>
    %14 = arith.addf %11, %13 : vector<8x128xf32>
    %cst_11 = arith.constant 0.000000e+00 : f32
    %15 = vector.broadcast %cst_11 : f32 to vector<8x128xf32>
    %16 = arith.maximumf %14, %15 : vector<8x128xf32>
    %17 = arith.truncf %16 : vector<8x128xf32> to vector<8x128xbf16>
    %c0_12 = arith.constant 0 : index
    %c0_13 = arith.constant 0 : index
    %18 = vector.load %arg6[%c0_12, %c0_13] : memref<128x8xbf16, #tpu.memory_space<vmem>>, vector<128x8xbf16>
    %cst_14 = arith.constant dense<0.000000e+00> : vector<8x8xf32>
    %19 = tpu.matmul %17, %18, %cst_14 {dimension_numbers = #tpu.dot_dimension_numbers<[1], [0], [0], [1], [0, 0, 1, 1], [], []>} : vector<8x128xbf16>, vector<128x8xbf16>, vector<8x8xf32> -> vector<8x8xf32>
    %c0_15 = arith.constant 0 : index
    %c0_16 = arith.constant 0 : index
    %20 = vector.load %arg7[%c0_15, %c0_16] : memref<1x8xf32, #tpu.memory_space<vmem>>, vector<1x8xf32>
    %21 = vector.broadcast %20 : vector<1x8xf32> to vector<8x8xf32>
    %22 = arith.addf %19, %21 : vector<8x8xf32>
    %c0_17 = arith.constant 0 : index
    %c0_18 = arith.constant 0 : index
    %23 = vector.load %arg8[%c0_17, %c0_18] : memref<8x8xf32, #tpu.memory_space<vmem>>, vector<8x8xf32>
    tpu.vector_store %arg8[%c0_17, %c0_18], %22 {strides = array<i32>} : memref<8x8xf32, #tpu.memory_space<vmem>>, vector<8x8xf32>,
    return
  }
  func.func @transform_0(%arg0: i32) -> (i32, i32) {
    %c0_i32 = arith.constant 0 : i32
    %c0_i32_0 = arith.constant 0 : i32
    return %arg0, %c0_i32 : i32, i32
  }
  func.func @transform_1(%arg0: i32) -> (i32, i32) {
    %c0_i32 = arith.constant 0 : i32
    %c0_i32_0 = arith.constant 0 : i32
    %c0_i32_1 = arith.constant 0 : i32
    return %c0_i32, %c0_i32_0 : i32, i32
  }
  func.func @transform_2(%arg0: i32) -> (i32, i32) {
    %c0_i32 = arith.constant 0 : i32
    %c0_i32_0 = arith.constant 0 : i32
    %c0_i32_1 = arith.constant 0 : i32
    return %c0_i32, %c0_i32_0 : i32, i32
  }
  func.func @transform_3(%arg0: i32) -> (i32, i32) {
    %c0_i32 = arith.constant 0 : i32
    %c0_i32_0 = arith.constant 0 : i32
    %c0_i32_1 = arith.constant 0 : i32
    return %c0_i32, %c0_i32_0 : i32, i32
  }
  func.func @transform_4(%arg0: i32) -> (i32, i32) {
    %c0_i32 = arith.constant 0 : i32
    %c0_i32_0 = arith.constant 0 : i32
    %c0_i32_1 = arith.constant 0 : i32
    return %c0_i32, %c0_i32_0 : i32, i32
  }
  func.func @transform_5(%arg0: i32) -> (i32, i32) {
    %c0_i32 = arith.constant 0 : i32
    %c0_i32_0 = arith.constant 0 : i32
    %c0_i32_1 = arith.constant 0 : i32
    return %c0_i32, %c0_i32_0 : i32, i32
  }
  func.func @transform_6(%arg0: i32) -> (i32, i32) {
    %c0_i32 = arith.constant 0 : i32
    %c0_i32_0 = arith.constant 0 : i32
    %c0_i32_1 = arith.constant 0 : i32
    return %c0_i32, %c0_i32_0 : i32, i32
  }
  func.func @transform_7(%arg0: i32) -> (i32, i32) {
    %c0_i32 = arith.constant 0 : i32
    %c0_i32_0 = arith.constant 0 : i32
    return %arg0, %c0_i32 : i32, i32
  }
}

</mosaic_0001>

<llo_original>
// kernel: policy_forward.1
$region0: #{policy_forward.1}
  #allocation0 [shape = 'u32[]', space=smem, size = 0x4, offset = 0x4, fixed_abs, tag = 'smem constant byte address 0x4 - core index']
  #allocation1 [shape = 'u32[72,128]{1,0:T(1,128)}', space=vmem, size = 0x9000, scoped, tag = 'internal scratch']
  %s0 = inlined_call_operand.hbm [shape: f32[8,32], index: 0, kind: input, shape index: {}]
  %s1 = inlined_call_operand.hbm [shape: bf16[32,128], index: 1, kind: input, shape index: {}]
  %s2 = inlined_call_operand.vmem [shape: f32[1,128], index: 2, kind: input, shape index: {}]
  %s3 = inlined_call_operand.vmem [shape: bf16[128,128], index: 3, kind: input, shape index: {}]
  %s4 = inlined_call_operand.vmem [shape: f32[1,128], index: 4, kind: input, shape index: {}]
  %s5 = inlined_call_operand.vmem [shape: bf16[128,8], index: 5, kind: input, shape index: {}]
  %s6 = inlined_call_operand.vmem [shape: f32[1,8], index: 6, kind: input, shape index: {}]
  %s7 = inlined_call_operand.hbm [shape: f32[8,8], index: 7, kind: output, shape index: {}]
  %s8 = sld [smem:[#allocation0]]
  $region46: #{policy_forward.1} parent=0
    _
  %s10 = ssub.s32 1, %s8
  %s11 = scalar_select 0, %s10, %s8
  $region1: #{policy_forward.1} parent=0
    #allocation2 [shape = 'u8[4096]{0}', space=vmem, size = 0x1000, scoped, tag = 'input window, operand 0, single buffered']
    #allocation3 [shape = 's32[1]{0}', space=sflag, size = 0x4, scoped, tag = 'scoped memory for policy_forward.1']
    #allocation4 [shape = 's32[1]{0}', space=sflag, size = 0x4, scoped, tag = 'scoped memory for policy_forward.1']
    #allocation5 [shape = 'u8[8192]{0}', space=vmem, size = 0x2000, scoped, tag = 'input window, operand 1, single buffered']
    #allocation6 [shape = 's32[1]{0}', space=sflag, size = 0x4, scoped, tag = 'scoped memory for policy_forward.1']
    #allocation7 [shape = 'u8[4096]{0}', space=vmem, size = 0x1000, scoped, tag = 'output window, operand 0, single buffered']
    %12 = vsyncpa [#allocation3], 0
    %13 = vsyncpa [#allocation6], 0
    %14 = vsyncpa [#allocation4], 0
    // Predicated region
    $region2: #{policy_forward.1} parent=1 // pred_check
      _
    $region3: #{policy_forward.1} parent=1 // pred_check_branch
      %16 = sbr.rel (0) target = $region5
    $region4: #{policy_forward.1} parent=1 // pred_region
      %18 = vsyncadd [#allocation3], 0
      %s20 = sshll.u32 %s0, 4
      %s21 = int_to_ptr.hbm [resolvable:$true] %s20
      %s22 = sshll.u32 [#allocation2], 4
      %s23 = int_to_ptr.vmem [resolvable:$true] %s22
      %25 = dma.hbm_to_vmem [thread:$0]  %s21, 128, %s23, [#allocation3]
    $region5: #{policy_forward.1} parent=1 // pred_fallthru
      _
    // Predicated region
    $region6: #{policy_forward.1} parent=1 // pred_check
      _
    $region7: #{policy_forward.1} parent=1 // pred_check_branch
      %27 = sbr.rel (0) target = $region9
    $region8: #{policy_forward.1} parent=1 // pred_region
      %29 = vsyncadd [#allocation6], 0
      %s30 = sshll.u32 %s1, 4
      %s31 = int_to_ptr.hbm [resolvable:$true] %s30
      %s32 = sshll.u32 [#allocation5], 4
      %s33 = int_to_ptr.vmem [resolvable:$true] %s32
      %38 = dma.hbm_to_vmem [thread:$0]  %s31, 256, %s33, [#allocation6], 64, 64, 4
    $region9: #{policy_forward.1} parent=1 // pred_fallthru
      _
    // Predicated region
    $region10: #{policy_forward.1} parent=1 // pred_check
      _
    $region11: #{policy_forward.1} parent=1 // pred_check_branch
      %40 = sbr.rel (0) target = $region13
    $region12: #{policy_forward.1} parent=1 // pred_region
      _
    $region13: #{policy_forward.1} parent=1 // pred_fallthru
      _
    // Predicated region
    $region14: #{policy_forward.1} parent=1 // pred_check
      _
    $region15: #{policy_forward.1} parent=1 // pred_check_branch
      %42 = sbr.rel (0) target = $region17
    $region16: #{policy_forward.1} parent=1 // pred_region
      _
    $region17: #{policy_forward.1} parent=1 // pred_fallthru
      _
    // Predicated region
    $region18: #{policy_forward.1} parent=1 // pred_check
      _
    $region19: #{policy_forward.1} parent=1 // pred_check_branch
      %44 = sbr.rel (0) target = $region21
    $region20: #{policy_forward.1} parent=1 // pred_region
      _
    $region21: #{policy_forward.1} parent=1 // pred_fallthru
      _
    // Predicated region
    $region22: #{policy_forward.1} parent=1 // pred_check
      _
    $region23: #{policy_forward.1} parent=1 // pred_check_branch
      %46 = sbr.rel (0) target = $region25
    $region24: #{policy_forward.1} parent=1 // pred_region
      _
    $region25: #{policy_forward.1} parent=1 // pred_fallthru
      _
    // Predicated region
    $region26: #{policy_forward.1} parent=1 // pred_check
      _
    $region27: #{policy_forward.1} parent=1 // pred_check_branch
      %48 = sbr.rel (0) target = $region29
    $region28: #{policy_forward.1} parent=1 // pred_region
      _
    $region29: #{policy_forward.1} parent=1 // pred_fallthru
      _
    // Predicated region
    $region30: #{policy_forward.1} parent=1 // pred_check
      _
    $region31: #{policy_forward.1} parent=1 // pred_check_branch
      %50 = sbr.rel (0) target = $region33
    $region32: #{policy_forward.1} parent=1 // pred_region
      %52 = dma.done [#allocation3], 128
    $region33: #{policy_forward.1} parent=1 // pred_fallthru
      _
    // Predicated region
    $region34: #{policy_forward.1} parent=1 // pred_check
      _
    $region35: #{policy_forward.1} parent=1 // pred_check_branch
      %54 = sbr.rel (0) target = $region37
    $region36: #{policy_forward.1} parent=1 // pred_region
      %56 = dma.done [#allocation6], 256
    $region37: #{policy_forward.1} parent=1 // pred_fallthru
      _
    %v58 = vld [vmem:[#allocation2] sm:$0xff]
    %v59 = vpack.c.bf16 %v58, %v58
    %v60 = vld [vmem:[#allocation5] sm:$0xf]
    %v61 = vld [vmem:[#allocation5 + $0x4] sm:$0xf]
    %v62 = vld [vmem:[#allocation5 + $0x8] sm:$0xf]
    %v63 = vld [vmem:[#allocation5 + $0xc] sm:$0xf]
    %v64 = vld [vmem:[%s2] sm:$0x1]
    %v66 = vperm.slane %v64, 0
    %v72 = vunpack.c.l.b16 %v60
    %v73 = vunpack.c.l.b16 %v61
    %v74 = vunpack.c.l.b16 %v62
    %v75 = vunpack.c.l.b16 %v63
    %v76 = vpack.c.b16 %v73, %v72
    %v77 = vpack.c.b16 %v75, %v74
    %vm80 = vcmask 261120
    %v82 = vsel %vm80, %v59, 0
    %84 = vmatpush.bf16.msra.mxu0 0
    %85 = vmatpush.bf16.msra.mxu0 0
    %86 = vmatpush.bf16.msra.mxu0 0
    %87 = vmatpush.bf16.msra.mxu0 0
    %88 = vmatpush.bf16.msra.mxu0 0
    %89 = vmatpush.bf16.msra.mxu0 0
    %90 = vmatpush.bf16.msra.mxu0 %v77
    %91 = vmatpush.bf16.msra.mxu0 %v76
    %92 = vmatmul.bf16.gmra.mxu0 %v82
    %v93 = vpop.f32.mrf.mxu0
    %v94 = vadd.f32 %v66, %v93
    %v95 = vpop.f32.mrf.mxu0
    %96 = vdwg.mxu0
    %v97 = vmax.f32 %v94, 0.0
    %v98 = vpack.c.bf16 %v97, %v97
    %v99 = vld [vmem:[%s3] sm:$0xf]
    %v100 = vld [vmem:[%s3 + $0x4] sm:$0xf]
    %v101 = vld [vmem:[%s3 + $0x8] sm:$0xf]
    %v102 = vld [vmem:[%s3 + $0xc] sm:$0xf]
    %v103 = vld [vmem:[%s3 + $0x10] sm:$0xf]
    %v104 = vld [vmem:[%s3 + $0x14] sm:$0xf]
    %v105 = vld [vmem:[%s3 + $0x18] sm:$0xf]
    %v106 = vld [vmem:[%s3 + $0x1c] sm:$0xf]
    %v107 = vld [vmem:[%s3 + $0x20] sm:$0xf]
    %v108 = vld [vmem:[%s3 + $0x24] sm:$0xf]
    %v109 = vld [vmem:[%s3 + $0x28] sm:$0xf]
    %v110 = vld [vmem:[%s3 + $0x2c] sm:$0xf]
    %v111 = vld [vmem:[%s3 + $0x30] sm:$0xf]
    %v112 = vld [vmem:[%s3 + $0x34] sm:$0xf]
    %v113 = vld [vmem:[%s3 + $0x38] sm:$0xf]
    %v114 = vld [vmem:[%s3 + $0x3c] sm:$0xf]
    %v115 = vld [vmem:[%s4] sm:$0x1]
    %v117 = vperm.slane %v115, 0
    %v135 = vunpack.c.l.b16 %v99
    %v136 = vunpack.c.l.b16 %v100
    %v137 = vunpack.c.l.b16 %v101
    %v138 = vunpack.c.l.b16 %v102
    %v139 = vunpack.c.l.b16 %v103
    %v140 = vunpack.c.l.b16 %v104
    %v141 = vunpack.c.l.b16 %v105
    %v142 = vunpack.c.l.b16 %v106
    %v143 = vunpack.c.l.b16 %v107
    %v144 = vunpack.c.l.b16 %v108
    %v145 = vunpack.c.l.b16 %v109
    %v146 = vunpack.c.l.b16 %v110
    %v147 = vunpack.c.l.b16 %v111
    %v148 = vunpack.c.l.b16 %v112
    %v149 = vunpack.c.l.b16 %v113
    %v150 = vunpack.c.l.b16 %v114
    %v151 = vpack.c.b16 %v136, %v135
    %v152 = vpack.c.b16 %v138, %v137
    %v153 = vpack.c.b16 %v140, %v139
    %v154 = vpack.c.b16 %v142, %v141
    %v155 = vpack.c.b16 %v144, %v143
    %v156 = vpack.c.b16 %v146, %v145
    %v157 = vpack.c.b16 %v148, %v147
    %v158 = vpack.c.b16 %v150, %v149
    %167 = vmatpush.bf16.msra.mxu0 %v158
    %168 = vmatpush.bf16.msra.mxu0 %v157
    %169 = vmatpush.bf16.msra.mxu0 %v156
    %170 = vmatpush.bf16.msra.mxu0 %v155
    %171 = vmatpush.bf16.msra.mxu0 %v154
    %172 = vmatpush.bf16.msra.mxu0 %v153
    %173 = vmatpush.bf16.msra.mxu0 %v152
    %174 = vmatpush.bf16.msra.mxu0 %v151
    %175 = vmatmul.bf16.gmra.mxu0 %v98
    %v176 = vpop.f32.mrf.mxu0
    %v177 = vadd.f32 %v117, %v176
    %v178 = vpop.f32.mrf.mxu0
    %179 = vdwg.mxu0
    %v180 = vmax.f32 %v177, 0.0
    %v181 = vpack.c.bf16 %v180, %v180
    %v182 = vld [vmem:[%s5] sm:$0xf]
    %v183 = vld [vmem:[%s5 + $0x4] sm:$0xf]
    %v184 = vld [vmem:[%s5 + $0x8] sm:$0xf]
    %v185 = vld [vmem:[%s5 + $0xc] sm:$0xf]
    %v186 = vld [vmem:[%s5 + $0x10] sm:$0xf]
    %v187 = vld [vmem:[%s5 + $0x14] sm:$0xf]
    %v188 = vld [vmem:[%s5 + $0x18] sm:$0xf]
    %v189 = vld [vmem:[%s5 + $0x1c] sm:$0xf]
    %v190 = vld [vmem:[%s5 + $0x20] sm:$0xf]
    %v191 = vld [vmem:[%s5 + $0x24] sm:$0xf]
    %v192 = vld [vmem:[%s5 + $0x28] sm:$0xf]
    %v193 = vld [vmem:[%s5 + $0x2c] sm:$0xf]
    %v194 = vld [vmem:[%s5 + $0x30] sm:$0xf]
    %v195 = vld [vmem:[%s5 + $0x34] sm:$0xf]
    %v196 = vld [vmem:[%s5 + $0x38] sm:$0xf]
    %v197 = vld [vmem:[%s5 + $0x3c] sm:$0xf]
    %v198 = vld [vmem:[%s6] sm:$0x1]
    %v200 = vperm.slane %v198, 0
    %v218 = vunpack.c.l.b16 %v182
    %v219 = vunpack.c.l.b16 %v183
    %v220 = vunpack.c.l.b16 %v184
    %v221 = vunpack.c.l.b16 %v185
    %v222 = vunpack.c.l.b16 %v186
    %v223 = vunpack.c.l.b16 %v187
    %v224 = vunpack.c.l.b16 %v188
    %v225 = vunpack.c.l.b16 %v189
    %v226 = vunpack.c.l.b16 %v190
    %v227 = vunpack.c.l.b16 %v191
    %v228 = vunpack.c.l.b16 %v192
    %v229 = vunpack.c.l.b16 %v193
    %v230 = vunpack.c.l.b16 %v194
    %v231 = vunpack.c.l.b16 %v195
    %v232 = vunpack.c.l.b16 %v196
    %v233 = vunpack.c.l.b16 %v197
    %v234 = vpack.c.b16 %v219, %v218
    %v235 = vpack.c.b16 %v221, %v220
    %v236 = vpack.c.b16 %v223, %v222
    %v237 = vpack.c.b16 %v225, %v224
    %v238 = vpack.c.b16 %v227, %v226
    %v239 = vpack.c.b16 %v229, %v228
    %v240 = vpack.c.b16 %v231, %v230
    %v241 = vpack.c.b16 %v233, %v232
    %250 = vmatpush.bf16.msra.mxu0 %v241
    %251 = vmatpush.bf16.msra.mxu0 %v240
    %252 = vmatpush.bf16.msra.mxu0 %v239
    %253 = vmatpush.bf16.msra.mxu0 %v238
    %254 = vmatpush.bf16.msra.mxu0 %v237
    %255 = vmatpush.bf16.msra.mxu0 %v236
    %256 = vmatpush.bf16.msra.mxu0 %v235
    %257 = vmatpush.bf16.msra.mxu0 %v234
    %258 = vmatmul.bf16.gmra.mxu0 %v181
    %v259 = vpop.f32.mrf.mxu0
    %v260 = vadd.f32 %v200, %v259
    %v261 = vpop.f32.mrf.mxu0
    %262 = vdwg.mxu0
    %vm263 = vcmask 64512
    %264 = vst.msk [vmem:[#allocation7] sm:$0xff] %vm263, %v260
    // Predicated region
    $region38: #{policy_forward.1} parent=1 // pred_check
      _
    $region39: #{policy_forward.1} parent=1 // pred_check_branch
      %266 = sbr.rel (0) target = $region41
    $region40: #{policy_forward.1} parent=1 // pred_region
      %268 = vsyncadd [#allocation4], 0
      %s270 = sshll.u32 [#allocation7], 4
      %s271 = int_to_ptr.vmem [resolvable:$true] %s270
      %s272 = sshll.u32 %s7, 4
      %s273 = int_to_ptr.hbm [resolvable:$true] %s272
      %275 = dma.vmem_to_hbm [thread:$0]  %s271, 128, %s273, [#allocation4]
    $region41: #{policy_forward.1} parent=1 // pred_fallthru
      _
    // Predicated region
    $region42: #{policy_forward.1} parent=1 // pred_check
      _
    $region43: #{policy_forward.1} parent=1 // pred_check_branch
      %277 = sbr.rel (0) target = $region45
    $region44: #{policy_forward.1} parent=1 // pred_region
      %279 = dma.done [#allocation4], 128
    $region45: #{policy_forward.1} parent=1 // pred_fallthru
      _
    %280 = vsyncpa [#allocation3], 1
    %281 = vsyncpa [#allocation6], 1
    %282 = vsyncpa [#allocation4], 1

</llo_original>
